<compile_context>
chip_gen: v5e
topology: v5e:2x2
jax: 0.10.0
libtpu: 0.0.40
codegen_flags: <defaults>
</compile_context>

<pallas_src>
import functools
import math

import jax
import jax.numpy as jnp
from jax.experimental import pallas as pl
from jax.experimental.pallas import tpu as pltpu

NEG_SLOPE = 0.2
INV_SQRT2 = 1.0 / math.sqrt(2.0)


def _leaky(v):
    return jnp.where(v >= 0, v, NEG_SLOPE * v)


def _band_conv_weights(w_hwio, W, scale=1.0):
    """Per-kernel-row banded matmul weights for a SAME 3x3 conv (width halo folded in).

    w_hwio: (3, 3, Ci, Co).  Returns B of shape (3, W*Ci, W*Co) with
      B[kh][w_in*Ci + ci, w_out*Co + co] = w_hwio[kh, kw, ci, co],  w_in = w_out + kw - 1,
    out-of-range taps (the SAME border) dropped, so with rows lane-packed
    channel-minor and only a 1-row height halo:
      conv_out_row[h] = sum_kh x_rows[h + kh] @ B[kh]
    """
    _, _, Ci, Co = w_hwio.shape
    bands = []
    for kh in range(3):
        b = jnp.zeros((W * Ci, W * Co), jnp.float32)
        for kw in range(3):
            shift = jnp.eye(W, k=1 - kw, dtype=jnp.float32)   # w_in = w_out + kw - 1
            b = b + jnp.kron(shift, w_hwio[kh, kw].astype(jnp.float32))
        bands.append(b * scale)
    return jnp.stack(bands)


def _residual_block_kernel(*refs, Nb, H, W, Cin, Cout, identity_skip):
    if identity_skip:
        x_ref, b1_ref, b2_ref, o_ref, xa_ref, mid_ref = refs
        bskip_ref = None
    else:
        x_ref, b1_ref, b2_ref, bskip_ref, o_ref, xa_ref, mid_ref = refs

    f32 = jnp.float32
    bf16 = jnp.bfloat16
    Hp = H + 2                       # per-image row stride (1-row halo top/bottom)
    M = Nb * Hp - 2                  # rows fed to each banded matmul

    # ---- zero only the height-halo rows of xa (full-lane row stores).
    #      Done every step: each core has its own scratch under "parallel". ----
    zin = jnp.zeros((1, W * Cin), f32)
    for n in range(Nb):
        xa_ref[n * Hp:n * Hp + 1, :] = zin
        xa_ref[n * Hp + H + 1:n * Hp + H + 2, :] = zin

    # ---- leaky(x) computed once; lane-offset-0, full-width stores ----
    for n in range(Nb):
        xa_ref[n * Hp + 1:n * Hp + 1 + H, :] = _leaky(x_ref[n])

    # ---- conv1: 3 whole-stack MXU matmuls (bf16 inputs, f32 accumulation) ----
    acc1 = jnp.dot(xa_ref[0:M, :].astype(bf16), b1_ref[0],
                   preferred_element_type=f32)
    for kh in (1, 2):
        acc1 = acc1 + jnp.dot(xa_ref[kh:kh + M, :].astype(bf16), b1_ref[kh],
                              preferred_element_type=f32)

    # one big lane-dense store, then re-zero the interleaved halo rows
    mid_ref[1:1 + M, :] = _leaky(acc1)
    zmid = jnp.zeros((1, W * Cout), f32)
    for n in range(Nb):
        mid_ref[n * Hp:n * Hp + 1, :] = zmid
        mid_ref[n * Hp + H + 1:n * Hp + H + 2, :] = zmid

    # ---- conv2 (band weights pre-scaled by 1/sqrt(2) at trace time) ----
    acc2 = jnp.dot(mid_ref[0:M, :].astype(bf16), b2_ref[0],
                   preferred_element_type=f32)
    for kh in (1, 2):
        acc2 = acc2 + jnp.dot(mid_ref[kh:kh + M, :].astype(bf16), b2_ref[kh],
                              preferred_element_type=f32)

    # ---- skip + epilogue: a single add (scaling folded into the weights) ----
    if identity_skip:
        for n in range(Nb):
            o_ref[n] = (acc2[n * Hp:n * Hp + H, :]
                        + x_ref[n] * INV_SQRT2).astype(o_ref.dtype)
    else:
        xs = x_ref[...].reshape(Nb * H, W * Cin).astype(bf16)
        skip = jnp.dot(xs, bskip_ref[...], preferred_element_type=f32)
        for n in range(Nb):
            o_ref[n] = (acc2[n * Hp:n * Hp + H, :]
                        + skip[n * H:(n + 1) * H, :]).astype(o_ref.dtype)


def residual_block(x_nchw, w1_oihw, w2_oihw, wskip_oihw=None, block_batch=None):
    """PyTorch-convention inputs: x (N,Cin,H,W); conv weights OIHW; skip (Cout,Cin,1,1) or None."""
    x = jnp.transpose(x_nchw, (0, 2, 3, 1)).astype(jnp.float32)      # NHWC
    N, H, W, Cin = x.shape
    Cout = w1_oihw.shape[0]
    xf = x.reshape(N, H, W * Cin)                                    # lane-packed, channel-minor

    w1_hwio = jnp.transpose(w1_oihw, (2, 3, 1, 0)).astype(jnp.float32)
    w2_hwio = jnp.transpose(w2_oihw, (2, 3, 1, 0)).astype(jnp.float32)
    b1 = _band_conv_weights(w1_hwio, W).astype(jnp.bfloat16)                   # (3, W*Cin,  W*Cout)
    b2 = _band_conv_weights(w2_hwio, W, scale=INV_SQRT2).astype(jnp.bfloat16)  # (3, W*Cout, W*Cout)

    identity_skip = wskip_oihw is None
    if identity_skip:
        assert Cin == Cout, "identity skip requires dim_in == dim_out"

    # Images stacked per grid step into the matmul M dimension.  For large N,
    # cap Nb so the grid keeps >= 2 steps per TensorCore (v7x megacore) and
    # scratch stays modest; any divisor of N is correct.
    if block_batch is None:
        block_batch = 1
        for nb in range(1, min(N, 8) + 1):
            if N % nb == 0:
                block_batch = nb
    Nb = block_batch
    assert N % Nb == 0, "block_batch must divide the batch"

    kernel = functools.partial(_residual_block_kernel, Nb=Nb, H=H, W=W,
                               Cin=Cin, Cout=Cout, identity_skip=identity_skip)

    in_specs = [
        pl.BlockSpec((Nb, H, W * Cin), lambda b: (b, 0, 0)),
        pl.BlockSpec((3, W * Cin, W * Cout), lambda b: (0, 0, 0)),
        pl.BlockSpec((3, W * Cout, W * Cout), lambda b: (0, 0, 0)),
    ]
    args = [xf, b1, b2]
    if not identity_skip:
        wskip_io = wskip_oihw[:, :, 0, 0].T.astype(jnp.float32)                  # (Cin, Cout)
        bskip = (jnp.kron(jnp.eye(W, dtype=jnp.float32), wskip_io)
                 * INV_SQRT2).astype(jnp.bfloat16)                               # (W*Cin, W*Cout)
        in_specs.append(pl.BlockSpec((W * Cin, W * Cout), lambda b: (0, 0)))
        args.append(bskip)

    out = pl.pallas_call(
        kernel,
        out_shape=jax.ShapeDtypeStruct((N, H, W * Cout), jnp.float32),
        grid_spec=pltpu.PrefetchScalarGridSpec(
            num_scalar_prefetch=0,
            grid=(N // Nb,),
            in_specs=in_specs,
            out_specs=pl.BlockSpec((Nb, H, W * Cout), lambda b: (b, 0, 0)),
            scratch_shapes=[
                pltpu.VMEM((Nb * (H + 2), W * Cin), jnp.float32),   # leaky(x), interleaved halos
                pltpu.VMEM((Nb * (H + 2), W * Cout), jnp.float32),  # leaky(conv1), interleaved halos
            ],
        ),
        compiler_params=pltpu.CompilerParams(dimension_semantics=("parallel",)),
    )(*args)

    return jnp.transpose(out.reshape(N, H, W, Cout), (0, 3, 1, 2))   # back to NCHW


def reference(x_nchw, w1_oihw, w2_oihw, wskip_oihw=None):
    """Pure-JAX f32 reference (lax conv) for correctness check."""
    x = jnp.transpose(x_nchw, (0, 2, 3, 1))
    w1h = jnp.transpose(w1_oihw, (2, 3, 1, 0))
    w2h = jnp.transpose(w2_oihw, (2, 3, 1, 0))
    dn = ('NHWC', 'HWIO', 'NHWC')
    h1 = jax.lax.conv_general_dilated(_leaky(x), w1h, (1, 1), 'SAME', dimension_numbers=dn)
    h2 = jax.lax.conv_general_dilated(_leaky(h1), w2h, (1, 1), 'SAME', dimension_numbers=dn)
    if wskip_oihw is None:
        skip = x
    else:
        skip = jnp.einsum('nhwc,co->nhwo', x, wskip_oihw[:, :, 0, 0].T)
    return jnp.transpose((skip + h2) * INV_SQRT2, (0, 3, 1, 2))


if __name__ == "__main__":
    key = jax.random.PRNGKey(0)
    k1, k2, k3, k4, k5, k6, k7 = jax.random.split(key, 7)

    # bf16 MXU inputs (f32 accumulation) -> relaxed tolerance vs. the f32 reference.
    ATOL = RTOL = 5e-2

    # ---- case 1: dim_in != dim_out  ->  1x1-conv skip ----
    N, Cin, Cout, H, W = 2, 4, 8, 16, 16
    x = jax.random.normal(k1, (N, Cin, H, W), jnp.float32)
    w1 = jax.random.normal(k2, (Cout, Cin, 3, 3), jnp.float32) * (1.0 / math.sqrt(9 * Cin))
    w2 = jax.random.normal(k3, (Cout, Cout, 3, 3), jnp.float32) * (1.0 / math.sqrt(9 * Cout))
    wskip = jax.random.normal(k4, (Cout, Cin, 1, 1), jnp.float32) * (1.0 / math.sqrt(Cin))

    y = residual_block(x, w1, w2, wskip)
    jax.block_until_ready(y)
    y_ref = reference(x, w1, w2, wskip)
    assert y.shape == (N, Cout, H, W)
    err1 = float(jnp.max(jnp.abs(y - y_ref)))
    assert jnp.allclose(y, y_ref, atol=ATOL, rtol=RTOL), f"case1 max abs err {err1}"

    # ---- case 2: dim_in == dim_out  ->  identity skip ----
    C = 8
    x2 = jax.random.normal(k5, (N, C, H, W), jnp.float32)
    w1b = jax.random.normal(k6, (C, C, 3, 3), jnp.float32) * (1.0 / math.sqrt(9 * C))
    w2b = jax.random.normal(k7, (C, C, 3, 3), jnp.float32) * (1.0 / math.sqrt(9 * C))

    y2 = residual_block(x2, w1b, w2b, None)
    jax.block_until_ready(y2)
    y2_ref = reference(x2, w1b, w2b, None)
    err2 = float(jnp.max(jnp.abs(y2 - y2_ref)))
    assert jnp.allclose(y2, y2_ref, atol=ATOL, rtol=RTOL), f"case2 max abs err {err2}"

    print("KERNEL_OK")
</pallas_src>

<mosaic_0001>
module attributes {stable_mosaic.version = 11 : i64} {
  func.func @_residual_block_kernel(%arg0: i32, %arg1: memref<2x16x64xf32, #tpu.memory_space<vmem>>, %arg2: memref<3x64x128xbf16, #tpu.memory_space<vmem>>, %arg3: memref<3x128x128xbf16, #tpu.memory_space<vmem>>, %arg4: memref<64x128xbf16, #tpu.memory_space<vmem>>, %arg5: memref<2x16x128xf32, #tpu.memory_space<vmem>>, %arg6: memref<36x64xf32, #tpu.memory_space<vmem>>, %arg7: memref<36x128xf32, #tpu.memory_space<vmem>>) attributes {dimension_semantics = [#tpu.dimension_semantics<parallel>], iteration_bounds = array<i64: 1>, scalar_prefetch = 0 : i64, scratch_operands = 2 : i64, tpu.core_type = #tpu.core_type<tc>, window_params = [{transform_indices = @transform_0, window_bounds = array<i64: 2, 16, 64>}, {pipeline_mode = #tpu.pipeline_mode<synchronous>, transform_indices = @transform_1, window_bounds = array<i64: 3, 64, 128>}, {pipeline_mode = #tpu.pipeline_mode<synchronous>, transform_indices = @transform_2, window_bounds = array<i64: 3, 128, 128>}, {pipeline_mode = #tpu.pipeline_mode<synchronous>, transform_indices = @transform_3, window_bounds = array<i64: 64, 128>}, {transform_indices = @transform_4, window_bounds = array<i64: 2, 16, 128>}]} {
    %cst = arith.constant 0.000000e+00 : f32
    %0 = vector.broadcast %cst : f32 to vector<1x64xf32>
    %c0 = arith.constant 0 : index
    %c0_0 = arith.constant 0 : index
    %1 = vector.load %arg6[%c0, %c0_0] : memref<36x64xf32, #tpu.memory_space<vmem>>, vector<1x64xf32>
    tpu.vector_store %arg6[%c0, %c0_0], %0 {strides = array<i32>} : memref<36x64xf32, #tpu.memory_space<vmem>>, vector<1x64xf32>,
    %c17 = arith.constant 17 : index
    %c0_1 = arith.constant 0 : index
    %2 = vector.load %arg6[%c17, %c0_1] : memref<36x64xf32, #tpu.memory_space<vmem>>, vector<1x64xf32>
    tpu.vector_store %arg6[%c17, %c0_1], %0 {strides = array<i32>} : memref<36x64xf32, #tpu.memory_space<vmem>>, vector<1x64xf32>,
    %c18 = arith.constant 18 : index
    %c0_2 = arith.constant 0 : index
    %3 = vector.load %arg6[%c18, %c0_2] : memref<36x64xf32, #tpu.memory_space<vmem>>, vector<1x64xf32>
    tpu.vector_store %arg6[%c18, %c0_2], %0 {strides = array<i32>} : memref<36x64xf32, #tpu.memory_space<vmem>>, vector<1x64xf32>,
    %c35 = arith.constant 35 : index
    %c0_3 = arith.constant 0 : index
    %4 = vector.load %arg6[%c35, %c0_3] : memref<36x64xf32, #tpu.memory_space<vmem>>, vector<1x64xf32>
    tpu.vector_store %arg6[%c35, %c0_3], %0 {strides = array<i32>} : memref<36x64xf32, #tpu.memory_space<vmem>>, vector<1x64xf32>,
    %c0_4 = arith.constant 0 : index
    %c0_5 = arith.constant 0 : index
    %c0_6 = arith.constant 0 : index
    %5 = vector.load %arg1[%c0_4, %c0_5, %c0_6] : memref<2x16x64xf32, #tpu.memory_space<vmem>>, vector<1x16x64xf32>
    %6 = vector.shape_cast %5 : vector<1x16x64xf32> to vector<16x64xf32>
    %cst_7 = arith.constant 0.000000e+00 : f32
    %7 = vector.broadcast %cst_7 : f32 to vector<16x64xf32>
    %8 = arith.cmpf oge, %6, %7 : vector<16x64xf32>
    %cst_8 = arith.constant 2.000000e-01 : f32
    %9 = vector.broadcast %cst_8 : f32 to vector<16x64xf32>
    %10 = arith.mulf %9, %6 : vector<16x64xf32>
    %11 = arith.select %8, %6, %10 : vector<16x64xi1>, vector<16x64xf32>
    %c1 = arith.constant 1 : index
    %c0_9 = arith.constant 0 : index
    %12 = vector.load %arg6[%c1, %c0_9] : memref<36x64xf32, #tpu.memory_space<vmem>>, vector<16x64xf32>
    tpu.vector_store %arg6[%c1, %c0_9], %11 {strides = array<i32>} : memref<36x64xf32, #tpu.memory_space<vmem>>, vector<16x64xf32>,
    %c1_10 = arith.constant 1 : index
    %c0_11 = arith.constant 0 : index
    %c0_12 = arith.constant 0 : index
    %13 = vector.load %arg1[%c1_10, %c0_11, %c0_12] : memref<2x16x64xf32, #tpu.memory_space<vmem>>, vector<1x16x64xf32>
    %14 = vector.shape_cast %13 : vector<1x16x64xf32> to vector<16x64xf32>
    %cst_13 = arith.constant 0.000000e+00 : f32
    %15 = vector.broadcast %cst_13 : f32 to vector<16x64xf32>
    %16 = arith.cmpf oge, %14, %15 : vector<16x64xf32>
    %cst_14 = arith.constant 2.000000e-01 : f32
    %17 = vector.broadcast %cst_14 : f32 to vector<16x64xf32>
    %18 = arith.mulf %17, %14 : vector<16x64xf32>
    %19 = arith.select %16, %14, %18 : vector<16x64xi1>, vector<16x64xf32>
    %c19 = arith.constant 19 : index
    %c0_15 = arith.constant 0 : index
    %20 = vector.load %arg6[%c19, %c0_15] : memref<36x64xf32, #tpu.memory_space<vmem>>, vector<16x64xf32>
    tpu.vector_store %arg6[%c19, %c0_15], %19 {strides = array<i32>} : memref<36x64xf32, #tpu.memory_space<vmem>>, vector<16x64xf32>,
    %c0_16 = arith.constant 0 : index
    %c0_17 = arith.constant 0 : index
    %21 = vector.load %arg6[%c0_16, %c0_17] : memref<36x64xf32, #tpu.memory_space<vmem>>, vector<34x64xf32>
    %22 = arith.truncf %21 : vector<34x64xf32> to vector<34x64xbf16>
    %c0_18 = arith.constant 0 : index
    %c0_19 = arith.constant 0 : index
    %c0_20 = arith.constant 0 : index
    %23 = vector.load %arg2[%c0_18, %c0_19, %c0_20] : memref<3x64x128xbf16, #tpu.memory_space<vmem>>, vector<1x64x128xbf16>
    %24 = vector.shape_cast %23 : vector<1x64x128xbf16> to vector<64x128xbf16>
    %cst_21 = arith.constant dense<0.000000e+00> : vector<34x128xf32>
    %25 = tpu.matmul %22, %24, %cst_21 {dimension_numbers = #tpu.dot_dimension_numbers<[1], [0], [0], [1], [0, 0, 1, 1], [], []>} : vector<34x64xbf16>, vector<64x128xbf16>, vector<34x128xf32> -> vector<34x128xf32>
    %c1_22 = arith.constant 1 : index
    %c0_23 = arith.constant 0 : index
    %26 = vector.load %arg6[%c1_22, %c0_23] : memref<36x64xf32, #tpu.memory_space<vmem>>, vector<34x64xf32>
    %27 = arith.truncf %26 : vector<34x64xf32> to vector<34x64xbf16>
    %c1_24 = arith.constant 1 : index
    %c0_25 = arith.constant 0 : index
    %c0_26 = arith.constant 0 : index
    %28 = vector.load %arg2[%c1_24, %c0_25, %c0_26] : memref<3x64x128xbf16, #tpu.memory_space<vmem>>, vector<1x64x128xbf16>
    %29 = vector.shape_cast %28 : vector<1x64x128xbf16> to vector<64x128xbf16>
    %cst_27 = arith.constant dense<0.000000e+00> : vector<34x128xf32>
    %30 = tpu.matmul %27, %29, %cst_27 {dimension_numbers = #tpu.dot_dimension_numbers<[1], [0], [0], [1], [0, 0, 1, 1], [], []>} : vector<34x64xbf16>, vector<64x128xbf16>, vector<34x128xf32> -> vector<34x128xf32>
    %31 = arith.addf %25, %30 : vector<34x128xf32>
    %c2 = arith.constant 2 : index
    %c0_28 = arith.constant 0 : index
    %32 = vector.load %arg6[%c2, %c0_28] : memref<36x64xf32, #tpu.memory_space<vmem>>, vector<34x64xf32>
    %33 = arith.truncf %32 : vector<34x64xf32> to vector<34x64xbf16>
    %c2_29 = arith.constant 2 : index
    %c0_30 = arith.constant 0 : index
    %c0_31 = arith.constant 0 : index
    %34 = vector.load %arg2[%c2_29, %c0_30, %c0_31] : memref<3x64x128xbf16, #tpu.memory_space<vmem>>, vector<1x64x128xbf16>
    %35 = vector.shape_cast %34 : vector<1x64x128xbf16> to vector<64x128xbf16>
    %cst_32 = arith.constant dense<0.000000e+00> : vector<34x128xf32>
    %36 = tpu.matmul %33, %35, %cst_32 {dimension_numbers = #tpu.dot_dimension_numbers<[1], [0], [0], [1], [0, 0, 1, 1], [], []>} : vector<34x64xbf16>, vector<64x128xbf16>, vector<34x128xf32> -> vector<34x128xf32>
    %37 = arith.addf %31, %36 : vector<34x128xf32>
    %cst_33 = arith.constant 0.000000e+00 : f32
    %38 = vector.broadcast %cst_33 : f32 to vector<34x128xf32>
    %39 = arith.cmpf oge, %37, %38 : vector<34x128xf32>
    %cst_34 = arith.constant 2.000000e-01 : f32
    %40 = vector.broadcast %cst_34 : f32 to vector<34x128xf32>
    %41 = arith.mulf %40, %37 : vector<34x128xf32>
    %42 = arith.select %39, %37, %41 : vector<34x128xi1>, vector<34x128xf32>
    %c1_35 = arith.constant 1 : index
    %c0_36 = arith.constant 0 : index
    %43 = vector.load %arg7[%c1_35, %c0_36] : memref<36x128xf32, #tpu.memory_space<vmem>>, vector<34x128xf32>
    tpu.vector_store %arg7[%c1_35, %c0_36], %42 {strides = array<i32>} : memref<36x128xf32, #tpu.memory_space<vmem>>, vector<34x128xf32>,
    %cst_37 = arith.constant 0.000000e+00 : f32
    %44 = vector.broadcast %cst_37 : f32 to vector<1x128xf32>
    %c0_38 = arith.constant 0 : index
    %c0_39 = arith.constant 0 : index
    %45 = vector.load %arg7[%c0_38, %c0_39] : memref<36x128xf32, #tpu.memory_space<vmem>>, vector<1x128xf32>
    tpu.vector_store %arg7[%c0_38, %c0_39], %44 {strides = array<i32>} : memref<36x128xf32, #tpu.memory_space<vmem>>, vector<1x128xf32>,
    %c17_40 = arith.constant 17 : index
    %c0_41 = arith.constant 0 : index
    %46 = vector.load %arg7[%c17_40, %c0_41] : memref<36x128xf32, #tpu.memory_space<vmem>>, vector<1x128xf32>
    tpu.vector_store %arg7[%c17_40, %c0_41], %44 {strides = array<i32>} : memref<36x128xf32, #tpu.memory_space<vmem>>, vector<1x128xf32>,
    %c18_42 = arith.constant 18 : index
    %c0_43 = arith.constant 0 : index
    %47 = vector.load %arg7[%c18_42, %c0_43] : memref<36x128xf32, #tpu.memory_space<vmem>>, vector<1x128xf32>
    tpu.vector_store %arg7[%c18_42, %c0_43], %44 {strides = array<i32>} : memref<36x128xf32, #tpu.memory_space<vmem>>, vector<1x128xf32>,
    %c35_44 = arith.constant 35 : index
    %c0_45 = arith.constant 0 : index
    %48 = vector.load %arg7[%c35_44, %c0_45] : memref<36x128xf32, #tpu.memory_space<vmem>>, vector<1x128xf32>
    tpu.vector_store %arg7[%c35_44, %c0_45], %44 {strides = array<i32>} : memref<36x128xf32, #tpu.memory_space<vmem>>, vector<1x128xf32>,
    %c0_46 = arith.constant 0 : index
    %c0_47 = arith.constant 0 : index
    %49 = vector.load %arg7[%c0_46, %c0_47] : memref<36x128xf32, #tpu.memory_space<vmem>>, vector<34x128xf32>
    %50 = arith.truncf %49 : vector<34x128xf32> to vector<34x128xbf16>
    %c0_48 = arith.constant 0 : index
    %c0_49 = arith.constant 0 : index
    %c0_50 = arith.constant 0 : index
    %51 = vector.load %arg3[%c0_48, %c0_49, %c0_50] : memref<3x128x128xbf16, #tpu.memory_space<vmem>>, vector<1x128x128xbf16>
    %52 = vector.shape_cast %51 : vector<1x128x128xbf16> to vector<128x128xbf16>
    %cst_51 = arith.constant dense<0.000000e+00> : vector<34x128xf32>
    %53 = tpu.matmul %50, %52, %cst_51 {dimension_numbers = #tpu.dot_dimension_numbers<[1], [0], [0], [1], [0, 0, 1, 1], [], []>} : vector<34x128xbf16>, vector<128x128xbf16>, vector<34x128xf32> -> vector<34x128xf32>
    %c1_52 = arith.constant 1 : index
    %c0_53 = arith.constant 0 : index
    %54 = vector.load %arg7[%c1_52, %c0_53] : memref<36x128xf32, #tpu.memory_space<vmem>>, vector<34x128xf32>
    %55 = arith.truncf %54 : vector<34x128xf32> to vector<34x128xbf16>
    %c1_54 = arith.constant 1 : index
    %c0_55 = arith.constant 0 : index
    %c0_56 = arith.constant 0 : index
    %56 = vector.load %arg3[%c1_54, %c0_55, %c0_56] : memref<3x128x128xbf16, #tpu.memory_space<vmem>>, vector<1x128x128xbf16>
    %57 = vector.shape_cast %56 : vector<1x128x128xbf16> to vector<128x128xbf16>
    %cst_57 = arith.constant dense<0.000000e+00> : vector<34x128xf32>
    %58 = tpu.matmul %55, %57, %cst_57 {dimension_numbers = #tpu.dot_dimension_numbers<[1], [0], [0], [1], [0, 0, 1, 1], [], []>} : vector<34x128xbf16>, vector<128x128xbf16>, vector<34x128xf32> -> vector<34x128xf32>
    %59 = arith.addf %53, %58 : vector<34x128xf32>
    %c2_58 = arith.constant 2 : index
    %c0_59 = arith.constant 0 : index
    %60 = vector.load %arg7[%c2_58, %c0_59] : memref<36x128xf32, #tpu.memory_space<vmem>>, vector<34x128xf32>
    %61 = arith.truncf %60 : vector<34x128xf32> to vector<34x128xbf16>
    %c2_60 = arith.constant 2 : index
    %c0_61 = arith.constant 0 : index
    %c0_62 = arith.constant 0 : index
    %62 = vector.load %arg3[%c2_60, %c0_61, %c0_62] : memref<3x128x128xbf16, #tpu.memory_space<vmem>>, vector<1x128x128xbf16>
    %63 = vector.shape_cast %62 : vector<1x128x128xbf16> to vector<128x128xbf16>
    %cst_63 = arith.constant dense<0.000000e+00> : vector<34x128xf32>
    %64 = tpu.matmul %61, %63, %cst_63 {dimension_numbers = #tpu.dot_dimension_numbers<[1], [0], [0], [1], [0, 0, 1, 1], [], []>} : vector<34x128xbf16>, vector<128x128xbf16>, vector<34x128xf32> -> vector<34x128xf32>
    %65 = arith.addf %59, %64 : vector<34x128xf32>
    %c0_64 = arith.constant 0 : index
    %c0_65 = arith.constant 0 : index
    %c0_66 = arith.constant 0 : index
    %66 = vector.load %arg1[%c0_64, %c0_65, %c0_66] : memref<2x16x64xf32, #tpu.memory_space<vmem>>, vector<2x16x64xf32>
    %67 = vector.shape_cast %66 : vector<2x16x64xf32> to vector<32x64xf32>
    %68 = arith.truncf %67 : vector<32x64xf32> to vector<32x64xbf16>
    %c0_67 = arith.constant 0 : index
    %c0_68 = arith.constant 0 : index
    %69 = vector.load %arg4[%c0_67, %c0_68] : memref<64x128xbf16, #tpu.memory_space<vmem>>, vector<64x128xbf16>
    %cst_69 = arith.constant dense<0.000000e+00> : vector<32x128xf32>
    %70 = tpu.matmul %68, %69, %cst_69 {dimension_numbers = #tpu.dot_dimension_numbers<[1], [0], [0], [1], [0, 0, 1, 1], [], []>} : vector<32x64xbf16>, vector<64x128xbf16>, vector<32x128xf32> -> vector<32x128xf32>
    %71 = vector.extract_strided_slice %65 {offsets = [0, 0], sizes = [16, 128], strides = [1, 1]} : vector<34x128xf32> to vector<16x128xf32>
    %72 = vector.extract_strided_slice %70 {offsets = [0, 0], sizes = [16, 128], strides = [1, 1]} : vector<32x128xf32> to vector<16x128xf32>
    %73 = arith.addf %71, %72 : vector<16x128xf32>
    %c0_70 = arith.constant 0 : index
    %c0_71 = arith.constant 0 : index
    %c0_72 = arith.constant 0 : index
    %74 = vector.load %arg5[%c0_70, %c0_71, %c0_72] : memref<2x16x128xf32, #tpu.memory_space<vmem>>, vector<1x16x128xf32>
    %75 = vector.shape_cast %74 : vector<1x16x128xf32> to vector<16x128xf32>
    %76 = vector.shape_cast %73 : vector<16x128xf32> to vector<1x16x128xf32>
    tpu.vector_store %arg5[%c0_70, %c0_71, %c0_72], %76 {strides = array<i32>} : memref<2x16x128xf32, #tpu.memory_space<vmem>>, vector<1x16x128xf32>,
    %77 = vector.extract_strided_slice %65 {offsets = [18, 0], sizes = [16, 128], strides = [1, 1]} : vector<34x128xf32> to vector<16x128xf32>
    %78 = vector.extract_strided_slice %70 {offsets = [16, 0], sizes = [16, 128], strides = [1, 1]} : vector<32x128xf32> to vector<16x128xf32>
    %79 = arith.addf %77, %78 : vector<16x128xf32>
    %c1_73 = arith.constant 1 : index
    %c0_74 = arith.constant 0 : index
    %c0_75 = arith.constant 0 : index
    %80 = vector.load %arg5[%c1_73, %c0_74, %c0_75] : memref<2x16x128xf32, #tpu.memory_space<vmem>>, vector<1x16x128xf32>
    %81 = vector.shape_cast %80 : vector<1x16x128xf32> to vector<16x128xf32>
    %82 = vector.shape_cast %79 : vector<16x128xf32> to vector<1x16x128xf32>
    tpu.vector_store %arg5[%c1_73, %c0_74, %c0_75], %82 {strides = array<i32>} : memref<2x16x128xf32, #tpu.memory_space<vmem>>, vector<1x16x128xf32>,
    return
  }
  func.func @transform_0(%arg0: i32) -> (i32, i32, i32) {
    %c0_i32 = arith.constant 0 : i32
    %c0_i32_0 = arith.constant 0 : i32
    %c0_i32_1 = arith.constant 0 : i32
    return %arg0, %c0_i32, %c0_i32_0 : i32, i32, i32
  }
  func.func @transform_1(%arg0: i32) -> (i32, i32, i32) {
    %c0_i32 = arith.constant 0 : i32
    %c0_i32_0 = arith.constant 0 : i32
    %c0_i32_1 = arith.constant 0 : i32
    %c0_i32_2 = arith.constant 0 : i32
    return %c0_i32, %c0_i32_0, %c0_i32_1 : i32, i32, i32
  }
  func.func @transform_2(%arg0: i32) -> (i32, i32, i32) {
    %c0_i32 = arith.constant 0 : i32
    %c0_i32_0 = arith.constant 0 : i32
    %c0_i32_1 = arith.constant 0 : i32
    %c0_i32_2 = arith.constant 0 : i32
    return %c0_i32, %c0_i32_0, %c0_i32_1 : i32, i32, i32
  }
  func.func @transform_3(%arg0: i32) -> (i32, i32) {
    %c0_i32 = arith.constant 0 : i32
    %c0_i32_0 = arith.constant 0 : i32
    %c0_i32_1 = arith.constant 0 : i32
    return %c0_i32, %c0_i32_0 : i32, i32
  }
  func.func @transform_4(%arg0: i32) -> (i32, i32, i32) {
    %c0_i32 = arith.constant 0 : i32
    %c0_i32_0 = arith.constant 0 : i32
    %c0_i32_1 = arith.constant 0 : i32
    return %arg0, %c0_i32, %c0_i32_0 : i32, i32, i32
  }
}

</mosaic_0001>

<llo_original>
// kernel: tpu_custom_call.1
$region0: #{tpu_custom_call.1}
  #allocation0 [shape = 'u32[]', space=smem, size = 0x4, offset = 0x4, fixed_abs, tag = 'smem constant byte address 0x4 - core index']
  #allocation1 [shape = 'u32[72,128]{1,0:T(1,128)}', space=vmem, size = 0x9000, scoped, tag = 'internal scratch']
  #allocation2 [shape = 'f32[36,64]{1,0:T(8,128)}', space=vmem, size = 0x5000, scoped, tag = 'scratch operand']
  #allocation3 [shape = 'f32[36,128]{1,0:T(8,128)}', space=vmem, size = 0x5000, scoped, tag = 'scratch operand']
  %s0 = inlined_call_operand.hbm [shape: f32[2,16,64], index: 0, kind: input, shape index: {}]
  %s1 = inlined_call_operand.hbm [shape: bf16[3,64,128], index: 1, kind: input, shape index: {}]
  %s2 = inlined_call_operand.hbm [shape: bf16[3,128,128], index: 2, kind: input, shape index: {}]
  %s3 = inlined_call_operand.hbm [shape: bf16[64,128], index: 3, kind: input, shape index: {}]
  %s4 = inlined_call_operand.hbm [shape: f32[2,16,128], index: 4, kind: output, shape index: {}]
  %s5 = sld [smem:[#allocation0]]
  $region42: #{tpu_custom_call.1} parent=0
    _
  %s7 = ssub.s32 1, %s5
  %s8 = scalar_select 0, %s7, %s5
  $region1: #{tpu_custom_call.1} parent=0
    #allocation4 [shape = 'u8[16384]{0}', space=vmem, size = 0x4000, scoped, tag = 'input window, operand 0, single buffered']
    #allocation5 [shape = 's32[1]{0}', space=sflag, size = 0x4, scoped, tag = 'scoped memory for tpu_custom_call.1']
    #allocation6 [shape = 's32[1]{0}', space=sflag, size = 0x4, scoped, tag = 'scoped memory for tpu_custom_call.1']
    #allocation7 [shape = 'u8[49152]{0}', space=vmem, size = 0xc000, scoped, tag = 'input window, operand 1, single buffered']
    #allocation8 [shape = 's32[1]{0}', space=sflag, size = 0x4, scoped, tag = 'scoped memory for tpu_custom_call.1']
    #allocation9 [shape = 'u8[98304]{0}', space=vmem, size = 0x18000, scoped, tag = 'input window, operand 2, single buffered']
    #allocation10 [shape = 'u8[16384]{0}', space=vmem, size = 0x4000, scoped, tag = 'input window, operand 3, single buffered']
    #allocation11 [shape = 's32[1]{0}', space=sflag, size = 0x4, scoped, tag = 'scoped memory for tpu_custom_call.1']
    #allocation12 [shape = 'u8[16384]{0}', space=vmem, size = 0x4000, scoped, tag = 'output window, operand 0, single buffered']
    %9 = vsyncpa [#allocation5], 0
    %10 = vsyncpa [#allocation8], 0
    %11 = vsyncpa [#allocation11], 0
    %12 = vsyncpa [#allocation6], 0
    // Predicated region
    $region2: #{tpu_custom_call.1} parent=1 // pred_check
      _
    $region3: #{tpu_custom_call.1} parent=1 // pred_check_branch
      %14 = sbr.rel (0) target = $region5
    $region4: #{tpu_custom_call.1} parent=1 // pred_region
      %16 = vsyncadd [#allocation5], 0
      %s17 = sshll.u32 %s0, 4
      %s18 = int_to_ptr.hbm [resolvable:$true] %s17
      %s19 = sshll.u32 [#allocation4], 4
      %s20 = int_to_ptr.vmem [resolvable:$true] %s19
      %25 = dma.hbm_to_vmem [thread:$0]  %s18, 512, %s20, [#allocation5], 128, 128, 8
    $region5: #{tpu_custom_call.1} parent=1 // pred_fallthru
      _
    // Predicated region
    $region6: #{tpu_custom_call.1} parent=1 // pred_check
      _
    $region7: #{tpu_custom_call.1} parent=1 // pred_check_branch
      %27 = sbr.rel (0) target = $region9
    $region8: #{tpu_custom_call.1} parent=1 // pred_region
      %29 = vsyncadd [#allocation8], 0
      %s30 = sshll.u32 %s1, 4
      %s31 = int_to_ptr.hbm [resolvable:$true] %s30
      %s32 = sshll.u32 [#allocation7], 4
      %s33 = int_to_ptr.vmem [resolvable:$true] %s32
      %38 = dma.hbm_to_vmem [thread:$0]  %s31, 1536, %s33, [#allocation8], 64, 64, 4
    $region9: #{tpu_custom_call.1} parent=1 // pred_fallthru
      _
    // Predicated region
    $region10: #{tpu_custom_call.1} parent=1 // pred_check
      _
    $region11: #{tpu_custom_call.1} parent=1 // pred_check_branch
      %40 = sbr.rel (0) target = $region13
    $region12: #{tpu_custom_call.1} parent=1 // pred_region
      %42 = vsyncadd [#allocation8], 0
      %s43 = sshll.u32 %s2, 4
      %s44 = int_to_ptr.hbm [resolvable:$true] %s43
      %s45 = sshll.u32 [#allocation9], 4
      %s46 = int_to_ptr.vmem [resolvable:$true] %s45
      %51 = dma.hbm_to_vmem [thread:$0]  %s44, 3072, %s46, [#allocation8], 64, 64, 4
    $region13: #{tpu_custom_call.1} parent=1 // pred_fallthru
      _
    // Predicated region
    $region14: #{tpu_custom_call.1} parent=1 // pred_check
      _
    $region15: #{tpu_custom_call.1} parent=1 // pred_check_branch
      %53 = sbr.rel (0) target = $region17
    $region16: #{tpu_custom_call.1} parent=1 // pred_region
      %55 = vsyncadd [#allocation11], 0
      %s56 = sshll.u32 %s3, 4
      %s57 = int_to_ptr.hbm [resolvable:$true] %s56
      %s58 = sshll.u32 [#allocation10], 4
      %s59 = int_to_ptr.vmem [resolvable:$true] %s58
      %64 = dma.hbm_to_vmem [thread:$0]  %s57, 512, %s59, [#allocation11], 64, 64, 4
    $region17: #{tpu_custom_call.1} parent=1 // pred_fallthru
      _
    // Predicated region
    $region18: #{tpu_custom_call.1} parent=1 // pred_check
      _
    $region19: #{tpu_custom_call.1} parent=1 // pred_check_branch
      %66 = sbr.rel (0) target = $region21
    $region20: #{tpu_custom_call.1} parent=1 // pred_region
      %68 = dma.done [#allocation5], 512
    $region21: #{tpu_custom_call.1} parent=1 // pred_fallthru
      _
    // Predicated region
    $region22: #{tpu_custom_call.1} parent=1 // pred_check
      _
    $region23: #{tpu_custom_call.1} parent=1 // pred_check_branch
      %70 = sbr.rel (0) target = $region25
    $region24: #{tpu_custom_call.1} parent=1 // pred_region
      %72 = dma.done [#allocation8], 1536
    $region25: #{tpu_custom_call.1} parent=1 // pred_fallthru
      _
    // Predicated region
    $region26: #{tpu_custom_call.1} parent=1 // pred_check
      _
    $region27: #{tpu_custom_call.1} parent=1 // pred_check_branch
      %74 = sbr.rel (0) target = $region29
    $region28: #{tpu_custom_call.1} parent=1 // pred_region
      %76 = dma.done [#allocation8], 3072
    $region29: #{tpu_custom_call.1} parent=1 // pred_fallthru
      _
    // Predicated region
    $region30: #{tpu_custom_call.1} parent=1 // pred_check
      _
    $region31: #{tpu_custom_call.1} parent=1 // pred_check_branch
      %78 = sbr.rel (0) target = $region33
    $region32: #{tpu_custom_call.1} parent=1 // pred_region
      %80 = dma.done [#allocation11], 512
    $region33: #{tpu_custom_call.1} parent=1 // pred_fallthru
      _
    %vm82 = vcmask 516096
    %83 = vst.msk [vmem:[#allocation2] sm:$0x1] %vm82, 0.0
    %84 = vst.msk [vmem:[#allocation2 + $0x11] sm:$0x1] %vm82, 0.0
    %85 = vst.msk [vmem:[#allocation2 + $0x12] sm:$0x1] %vm82, 0.0
    %86 = vst.msk [vmem:[#allocation2 + $0x23] sm:$0x1] %vm82, 0.0
    %v87 = vld [vmem:[#allocation4] sm:$0xff]
    %v88 = vld [vmem:[#allocation4 + $0x8] sm:$0xff]
    %vm89 = vcmp.ge.f32.partialorder %v87, 0.0
    %vm90 = vcmp.ge.f32.partialorder %v88, 0.0
    %v91 = vmul.f32 %v87, 0.2
    %v92 = vmul.f32 %v88, 0.2
    %v93 = vsel %vm89, %v87, %v91
    %v94 = vsel %vm90, %v88, %v92
    %vm95 = vcmask 523264
    %96 = vst.msk [vmem:[#allocation2 + $0x1] sm:$0xff] %vm95, %v93
    %97 = vst.msk [vmem:[#allocation2 + $0x9] sm:$0xff] %vm95, %v94
    %s98 = scalar_lea.vmem [#allocation4], 16
    %v99 = vld [vmem:[%s98] sm:$0xff]
    %v100 = vld [vmem:[%s98 + $0x8] sm:$0xff]
    %vm101 = vcmp.ge.f32.partialorder %v99, 0.0
    %vm102 = vcmp.ge.f32.partialorder %v100, 0.0
    %v103 = vmul.f32 %v99, 0.2
    %v104 = vmul.f32 %v100, 0.2
    %v105 = vsel %vm101, %v99, %v103
    %v106 = vsel %vm102, %v100, %v104
    %107 = vst.msk [vmem:[#allocation2 + $0x13] sm:$0xff] %vm95, %v105
    %108 = vst.msk [vmem:[#allocation2 + $0x1b] sm:$0xff] %vm95, %v106
    %v109 = vld [vmem:[#allocation2] sm:$0xff]
    %v110 = vld [vmem:[#allocation2 + $0x8] sm:$0xff]
    %v111 = vld [vmem:[#allocation2 + $0x10] sm:$0xff]
    %v112 = vld [vmem:[#allocation2 + $0x18] sm:$0xff]
    %v113 = vld [vmem:[#allocation2 + $0x20] sm:$0x3]
    %v114 = vpack.c.bf16 %v110, %v109
    %v115 = vpack.c.bf16 %v112, %v111
    %v116 = vpack.c.bf16 %v113, %v113
    %v117 = vld [vmem:[#allocation7] sm:$0xf]
    %v118 = vld [vmem:[#allocation7 + $0x4] sm:$0xf]
    %v119 = vld [vmem:[#allocation7 + $0x8] sm:$0xf]
    %v120 = vld [vmem:[#allocation7 + $0xc] sm:$0xf]
    %v121 = vld [vmem:[#allocation7 + $0x10] sm:$0xf]
    %v122 = vld [vmem:[#allocation7 + $0x14] sm:$0xf]
    %v123 = vld [vmem:[#allocation7 + $0x18] sm:$0xf]
    %v124 = vld [vmem:[#allocation7 + $0x1c] sm:$0xf]
    %v125 = vld [vmem:[#allocation2 + $0x1] sm:$0xff]
    %v126 = vld [vmem:[#allocation2 + $0x9] sm:$0xff]
    %v127 = vld [vmem:[#allocation2 + $0x11] sm:$0xff]
    %v128 = vld [vmem:[#allocation2 + $0x19] sm:$0xff]
    %v129 = vld [vmem:[#allocation2 + $0x21] sm:$0x3]
    %v130 = vpack.c.bf16 %v126, %v125
    %v131 = vpack.c.bf16 %v128, %v127
    %v132 = vpack.c.bf16 %v129, %v129
    %s133 = scalar_lea.vmem [#allocation7], 32
    %v134 = vld [vmem:[%s133] sm:$0xf]
    %v135 = vld [vmem:[%s133 + $0x4] sm:$0xf]
    %v136 = vld [vmem:[%s133 + $0x8] sm:$0xf]
    %v137 = vld [vmem:[%s133 + $0xc] sm:$0xf]
    %v138 = vld [vmem:[%s133 + $0x10] sm:$0xf]
    %v139 = vld [vmem:[%s133 + $0x14] sm:$0xf]
    %v140 = vld [vmem:[%s133 + $0x18] sm:$0xf]
    %v141 = vld [vmem:[%s133 + $0x1c] sm:$0xf]
    %v150 = vunpack.c.l.b16 %v134
    %v151 = vunpack.c.l.b16 %v135
    %v152 = vunpack.c.l.b16 %v136
    %v153 = vunpack.c.l.b16 %v137
    %v154 = vunpack.c.l.b16 %v138
    %v155 = vunpack.c.l.b16 %v139
    %v156 = vunpack.c.l.b16 %v140
    %v157 = vunpack.c.l.b16 %v141
    %v158 = vpack.c.b16 %v151, %v150
    %v159 = vpack.c.b16 %v153, %v152
    %v160 = vpack.c.b16 %v155, %v154
    %v161 = vpack.c.b16 %v157, %v156
    %v167 = vsel %vm95, %v130, 0
    %v170 = vsel %vm95, %v131, 0
    %v173 = vsel %vm95, %v132, 0
    %175 = vmatpush.bf16.msra.mxu0 0
    %176 = vmatpush.bf16.msra.mxu0 0
    %177 = vmatpush.bf16.msra.mxu0 0
    %178 = vmatpush.bf16.msra.mxu0 0
    %179 = vmatpush.bf16.msra.mxu0 %v161
    %180 = vmatpush.bf16.msra.mxu0 %v160
    %181 = vmatpush.bf16.msra.mxu0 %v159
    %182 = vmatpush.bf16.msra.mxu0 %v158
    %183 = vmatmul.bf16.gmra.mxu0 %v167
    %v184 = vpop.f32.mrf.mxu0
    %v185 = vadd.f32 0.0, %v184
    %v186 = vpop.f32.mrf.mxu0
    %v187 = vadd.f32 0.0, %v186
    %188 = vmatmul.bf16.gmra.mxu0 %v170
    %v189 = vpop.f32.mrf.mxu0
    %v190 = vadd.f32 0.0, %v189
    %v191 = vpop.f32.mrf.mxu0
    %v192 = vadd.f32 0.0, %v191
    %193 = vmatmul.bf16.gmra.mxu0 %v173
    %v194 = vpop.f32.mrf.mxu0
    %v195 = vadd.f32 0.0, %v194
    %v196 = vpop.f32.mrf.mxu0
    %197 = vdwg.mxu0
    %v206 = vunpack.c.l.b16 %v117
    %v207 = vunpack.c.l.b16 %v118
    %v208 = vunpack.c.l.b16 %v119
    %v209 = vunpack.c.l.b16 %v120
    %v210 = vunpack.c.l.b16 %v121
    %v211 = vunpack.c.l.b16 %v122
    %v212 = vunpack.c.l.b16 %v123
    %v213 = vunpack.c.l.b16 %v124
    %v214 = vpack.c.b16 %v207, %v206
    %v215 = vpack.c.b16 %v209, %v208
    %v216 = vpack.c.b16 %v211, %v210
    %v217 = vpack.c.b16 %v213, %v212
    %v223 = vsel %vm95, %v114, 0
    %v226 = vsel %vm95, %v115, 0
    %v229 = vsel %vm95, %v116, 0
    %231 = vmatpush.bf16.msra.mxu0 0
    %232 = vmatpush.bf16.msra.mxu0 0
    %233 = vmatpush.bf16.msra.mxu0 0
    %234 = vmatpush.bf16.msra.mxu0 0
    %235 = vmatpush.bf16.msra.mxu0 %v217
    %236 = vmatpush.bf16.msra.mxu0 %v216
    %237 = vmatpush.bf16.msra.mxu0 %v215
    %238 = vmatpush.bf16.msra.mxu0 %v214
    %239 = vmatmul.bf16.gmra.mxu0 %v223
    %v240 = vpop.f32.mrf.mxu0
    %v241 = vadd.f32 %v185, %v240
    %v242 = vpop.f32.mrf.mxu0
    %v243 = vadd.f32 %v187, %v242
    %244 = vmatmul.bf16.gmra.mxu0 %v226
    %v245 = vpop.f32.mrf.mxu0
    %v246 = vadd.f32 %v190, %v245
    %v247 = vpop.f32.mrf.mxu0
    %v248 = vadd.f32 %v192, %v247
    %249 = vmatmul.bf16.gmra.mxu0 %v229
    %v250 = vpop.f32.mrf.mxu0
    %v251 = vadd.f32 %v195, %v250
    %v252 = vpop.f32.mrf.mxu0
    %253 = vdwg.mxu0
    %v254 = vld [vmem:[#allocation2 + $0x2] sm:$0xff]
    %v255 = vld [vmem:[#allocation2 + $0xa] sm:$0xff]
    %v256 = vld [vmem:[#allocation2 + $0x12] sm:$0xff]
    %v257 = vld [vmem:[#allocation2 + $0x1a] sm:$0xff]
    %v258 = vld [vmem:[#allocation2 + $0x22] sm:$0x3]
    %v259 = vpack.c.bf16 %v255, %v254
    %v260 = vpack.c.bf16 %v257, %v256
    %v261 = vpack.c.bf16 %v258, %v258
    %s262 = scalar_lea.vmem [#allocation7], 64
    %v263 = vld [vmem:[%s262] sm:$0xf]
    %v264 = vld [vmem:[%s262 + $0x4] sm:$0xf]
    %v265 = vld [vmem:[%s262 + $0x8] sm:$0xf]
    %v266 = vld [vmem:[%s262 + $0xc] sm:$0xf]
    %v267 = vld [vmem:[%s262 + $0x10] sm:$0xf]
    %v268 = vld [vmem:[%s262 + $0x14] sm:$0xf]
    %v269 = vld [vmem:[%s262 + $0x18] sm:$0xf]
    %v270 = vld [vmem:[%s262 + $0x1c] sm:$0xf]
    %v279 = vunpack.c.l.b16 %v263
    %v280 = vunpack.c.l.b16 %v264
    %v281 = vunpack.c.l.b16 %v265
    %v282 = vunpack.c.l.b16 %v266
    %v283 = vunpack.c.l.b16 %v267
    %v284 = vunpack.c.l.b16 %v268
    %v285 = vunpack.c.l.b16 %v269
    %v286 = vunpack.c.l.b16 %v270
    %v287 = vpack.c.b16 %v280, %v279
    %v288 = vpack.c.b16 %v282, %v281
    %v289 = vpack.c.b16 %v284, %v283
    %v290 = vpack.c.b16 %v286, %v285
    %v296 = vsel %vm95, %v259, 0
    %v299 = vsel %vm95, %v260, 0
    %v302 = vsel %vm95, %v261, 0
    %304 = vmatpush.bf16.msra.mxu0 0
    %305 = vmatpush.bf16.msra.mxu0 0
    %306 = vmatpush.bf16.msra.mxu0 0
    %307 = vmatpush.bf16.msra.mxu0 0
    %308 = vmatpush.bf16.msra.mxu0 %v290
    %309 = vmatpush.bf16.msra.mxu0 %v289
    %310 = vmatpush.bf16.msra.mxu0 %v288
    %311 = vmatpush.bf16.msra.mxu0 %v287
    %312 = vmatmul.bf16.gmra.mxu0 %v296
    %v313 = vpop.f32.mrf.mxu0
    %v314 = vadd.f32 0.0, %v313
    %v315 = vpop.f32.mrf.mxu0
    %v316 = vadd.f32 0.0, %v315
    %317 = vmatmul.bf16.gmra.mxu0 %v299
    %v318 = vpop.f32.mrf.mxu0
    %v319 = vadd.f32 0.0, %v318
    %v320 = vpop.f32.mrf.mxu0
    %v321 = vadd.f32 0.0, %v320
    %322 = vmatmul.bf16.gmra.mxu0 %v302
    %v323 = vpop.f32.mrf.mxu0
    %v324 = vadd.f32 0.0, %v323
    %v325 = vpop.f32.mrf.mxu0
    %326 = vdwg.mxu0
    %v327 = vadd.f32 %v241, %v314
    %v328 = vadd.f32 %v243, %v316
    %v329 = vadd.f32 %v246, %v319
    %v330 = vadd.f32 %v248, %v321
    %v331 = vadd.f32 %v251, %v324
    %vm332 = vcmp.ge.f32.partialorder %v327, 0.0
    %vm333 = vcmp.ge.f32.partialorder %v328, 0.0
    %vm334 = vcmp.ge.f32.partialorder %v329, 0.0
    %vm335 = vcmp.ge.f32.partialorder %v330, 0.0
    %vm336 = vcmp.ge.f32.partialorder %v331, 0.0
    %v337 = vmul.f32 %v327, 0.2
    %v338 = vmul.f32 %v328, 0.2
    %v339 = vmul.f32 %v329, 0.2
    %v340 = vmul.f32 %v330, 0.2
    %v341 = vmul.f32 %v331, 0.2
    %v342 = vsel %vm332, %v327, %v337
    %v343 = vsel %vm333, %v328, %v338
    %v344 = vsel %vm334, %v329, %v339
    %v345 = vsel %vm335, %v330, %v340
    %v346 = vsel %vm336, %v331, %v341
    %347 = vst [vmem:[#allocation3 + $0x1] sm:$0xff] %v342
    %348 = vst [vmem:[#allocation3 + $0x9] sm:$0xff] %v343
    %349 = vst [vmem:[#allocation3 + $0x11] sm:$0xff] %v344
    %350 = vst [vmem:[#allocation3 + $0x19] sm:$0xff] %v345
    %351 = vst [vmem:[#allocation3 + $0x21] sm:$0x3] %v346
    %352 = vst [vmem:[#allocation3] sm:$0x1] 0.0
    %353 = vst [vmem:[#allocation3 + $0x11] sm:$0x1] 0.0
    %354 = vst [vmem:[#allocation3 + $0x12] sm:$0x1] 0.0
    %355 = vst [vmem:[#allocation3 + $0x23] sm:$0x1] 0.0
    %v356 = vld [vmem:[#allocation3] sm:$0xff]
    %v357 = vld [vmem:[#allocation3 + $0x8] sm:$0xff]
    %v358 = vld [vmem:[#allocation3 + $0x10] sm:$0xff]
    %v359 = vld [vmem:[#allocation3 + $0x18] sm:$0xff]
    %v360 = vld [vmem:[#allocation3 + $0x20] sm:$0x3]
    %v361 = vpack.c.bf16 %v357, %v356
    %v362 = vpack.c.bf16 %v359, %v358
    %v363 = vpack.c.bf16 %v360, %v360
    %v364 = vld [vmem:[#allocation9] sm:$0xf]
    %v365 = vld [vmem:[#allocation9 + $0x4] sm:$0xf]
    %v366 = vld [vmem:[#allocation9 + $0x8] sm:$0xf]
    %v367 = vld [vmem:[#allocation9 + $0xc] sm:$0xf]
    %v368 = vld [vmem:[#allocation9 + $0x10] sm:$0xf]
    %v369 = vld [vmem:[#allocation9 + $0x14] sm:$0xf]
    %v370 = vld [vmem:[#allocation9 + $0x18] sm:$0xf]
    %v371 = vld [vmem:[#allocation9 + $0x1c] sm:$0xf]
    %v372 = vld [vmem:[#allocation9 + $0x20] sm:$0xf]
    %v373 = vld [vmem:[#allocation9 + $0x24] sm:$0xf]
    %v374 = vld [vmem:[#allocation9 + $0x28] sm:$0xf]
    %v375 = vld [vmem:[#allocation9 + $0x2c] sm:$0xf]
    %v376 = vld [vmem:[#allocation9 + $0x30] sm:$0xf]
    %v377 = vld [vmem:[#allocation9 + $0x34] sm:$0xf]
    %v378 = vld [vmem:[#allocation9 + $0x38] sm:$0xf]
    %v379 = vld [vmem:[#allocation9 + $0x3c] sm:$0xf]
    %v380 = vld [vmem:[#allocation3 + $0x1] sm:$0xff]
    %v381 = vld [vmem:[#allocation3 + $0x9] sm:$0xff]
    %v382 = vld [vmem:[#allocation3 + $0x11] sm:$0xff]
    %v383 = vld [vmem:[#allocation3 + $0x19] sm:$0xff]
    %v384 = vld [vmem:[#allocation3 + $0x21] sm:$0x3]
    %v385 = vpack.c.bf16 %v381, %v380
    %v386 = vpack.c.bf16 %v383, %v382
    %v387 = vpack.c.bf16 %v384, %v384
    %s388 = scalar_lea.vmem [#allocation9], 64
    %v389 = vld [vmem:[%s388] sm:$0xf]
    %v390 = vld [vmem:[%s388 + $0x4] sm:$0xf]
    %v391 = vld [vmem:[%s388 + $0x8] sm:$0xf]
    %v392 = vld [vmem:[%s388 + $0xc] sm:$0xf]
    %v393 = vld [vmem:[%s388 + $0x10] sm:$0xf]
    %v394 = vld [vmem:[%s388 + $0x14] sm:$0xf]
    %v395 = vld [vmem:[%s388 + $0x18] sm:$0xf]
    %v396 = vld [vmem:[%s388 + $0x1c] sm:$0xf]
    %v397 = vld [vmem:[%s388 + $0x20] sm:$0xf]
    %v398 = vld [vmem:[%s388 + $0x24] sm:$0xf]
    %v399 = vld [vmem:[%s388 + $0x28] sm:$0xf]
    %v400 = vld [vmem:[%s388 + $0x2c] sm:$0xf]
    %v401 = vld [vmem:[%s388 + $0x30] sm:$0xf]
    %v402 = vld [vmem:[%s388 + $0x34] sm:$0xf]
    %v403 = vld [vmem:[%s388 + $0x38] sm:$0xf]
    %v404 = vld [vmem:[%s388 + $0x3c] sm:$0xf]
    %v421 = vunpack.c.l.b16 %v389
    %v422 = vunpack.c.l.b16 %v390
    %v423 = vunpack.c.l.b16 %v391
    %v424 = vunpack.c.l.b16 %v392
    %v425 = vunpack.c.l.b16 %v393
    %v426 = vunpack.c.l.b16 %v394
    %v427 = vunpack.c.l.b16 %v395
    %v428 = vunpack.c.l.b16 %v396
    %v429 = vunpack.c.l.b16 %v397
    %v430 = vunpack.c.l.b16 %v398
    %v431 = vunpack.c.l.b16 %v399
    %v432 = vunpack.c.l.b16 %v400
    %v433 = vunpack.c.l.b16 %v401
    %v434 = vunpack.c.l.b16 %v402
    %v435 = vunpack.c.l.b16 %v403
    %v436 = vunpack.c.l.b16 %v404
    %v437 = vpack.c.b16 %v422, %v421
    %v438 = vpack.c.b16 %v424, %v423
    %v439 = vpack.c.b16 %v426, %v425
    %v440 = vpack.c.b16 %v428, %v427
    %v441 = vpack.c.b16 %v430, %v429
    %v442 = vpack.c.b16 %v432, %v431
    %v443 = vpack.c.b16 %v434, %v433
    %v444 = vpack.c.b16 %v436, %v435
    %453 = vmatpush.bf16.msra.mxu0 %v444
    %454 = vmatpush.bf16.msra.mxu0 %v443
    %455 = vmatpush.bf16.msra.mxu0 %v442
    %456 = vmatpush.bf16.msra.mxu0 %v441
    %457 = vmatpush.bf16.msra.mxu0 %v440
    %458 = vmatpush.bf16.msra.mxu0 %v439
    %459 = vmatpush.bf16.msra.mxu0 %v438
    %460 = vmatpush.bf16.msra.mxu0 %v437
    %461 = vmatmul.bf16.gmra.mxu0 %v385
    %v462 = vpop.f32.mrf.mxu0
    %v463 = vadd.f32 0.0, %v462
    %v464 = vpop.f32.mrf.mxu0
    %v465 = vadd.f32 0.0, %v464
    %466 = vmatmul.bf16.gmra.mxu0 %v386
    %v467 = vpop.f32.mrf.mxu0
    %v468 = vadd.f32 0.0, %v467
    %v469 = vpop.f32.mrf.mxu0
    %v470 = vadd.f32 0.0, %v469
    %471 = vmatmul.bf16.gmra.mxu0 %v387
    %v472 = vpop.f32.mrf.mxu0
    %v473 = vadd.f32 0.0, %v472
    %v474 = vpop.f32.mrf.mxu0
    %475 = vdwg.mxu0
    %v492 = vunpack.c.l.b16 %v364
    %v493 = vunpack.c.l.b16 %v365
    %v494 = vunpack.c.l.b16 %v366
    %v495 = vunpack.c.l.b16 %v367
    %v496 = vunpack.c.l.b16 %v368
    %v497 = vunpack.c.l.b16 %v369
    %v498 = vunpack.c.l.b16 %v370
    %v499 = vunpack.c.l.b16 %v371
    %v500 = vunpack.c.l.b16 %v372
    %v501 = vunpack.c.l.b16 %v373
    %v502 = vunpack.c.l.b16 %v374
    %v503 = vunpack.c.l.b16 %v375
    %v504 = vunpack.c.l.b16 %v376
    %v505 = vunpack.c.l.b16 %v377
    %v506 = vunpack.c.l.b16 %v378
    %v507 = vunpack.c.l.b16 %v379
    %v508 = vpack.c.b16 %v493, %v492
    %v509 = vpack.c.b16 %v495, %v494
    %v510 = vpack.c.b16 %v497, %v496
    %v511 = vpack.c.b16 %v499, %v498
    %v512 = vpack.c.b16 %v501, %v500
    %v513 = vpack.c.b16 %v503, %v502
    %v514 = vpack.c.b16 %v505, %v504
    %v515 = vpack.c.b16 %v507, %v506
    %524 = vmatpush.bf16.msra.mxu0 %v515
    %525 = vmatpush.bf16.msra.mxu0 %v514
    %526 = vmatpush.bf16.msra.mxu0 %v513
    %527 = vmatpush.bf16.msra.mxu0 %v512
    %528 = vmatpush.bf16.msra.mxu0 %v511
    %529 = vmatpush.bf16.msra.mxu0 %v510
    %530 = vmatpush.bf16.msra.mxu0 %v509
    %531 = vmatpush.bf16.msra.mxu0 %v508
    %532 = vmatmul.bf16.gmra.mxu0 %v361
    %v533 = vpop.f32.mrf.mxu0
    %v534 = vadd.f32 %v463, %v533
    %v535 = vpop.f32.mrf.mxu0
    %v536 = vadd.f32 %v465, %v535
    %537 = vmatmul.bf16.gmra.mxu0 %v362
    %v538 = vpop.f32.mrf.mxu0
    %v539 = vadd.f32 %v468, %v538
    %v540 = vpop.f32.mrf.mxu0
    %v541 = vadd.f32 %v470, %v540
    %542 = vmatmul.bf16.gmra.mxu0 %v363
    %v543 = vpop.f32.mrf.mxu0
    %v544 = vadd.f32 %v473, %v543
    %v545 = vpop.f32.mrf.mxu0
    %546 = vdwg.mxu0
    %v547 = vld [vmem:[#allocation3 + $0x2] sm:$0xff]
    %v548 = vld [vmem:[#allocation3 + $0xa] sm:$0xff]
    %v549 = vld [vmem:[#allocation3 + $0x12] sm:$0xff]
    %v550 = vld [vmem:[#allocation3 + $0x1a] sm:$0xff]
    %v551 = vld [vmem:[#allocation3 + $0x22] sm:$0x3]
    %v552 = vpack.c.bf16 %v548, %v547
    %v553 = vpack.c.bf16 %v550, %v549
    %v554 = vpack.c.bf16 %v551, %v551
    %s555 = scalar_lea.vmem [#allocation9], 128
    %v556 = vld [vmem:[%s555] sm:$0xf]
    %v557 = vld [vmem:[%s555 + $0x4] sm:$0xf]
    %v558 = vld [vmem:[%s555 + $0x8] sm:$0xf]
    %v559 = vld [vmem:[%s555 + $0xc] sm:$0xf]
    %v560 = vld [vmem:[%s555 + $0x10] sm:$0xf]
    %v561 = vld [vmem:[%s555 + $0x14] sm:$0xf]
    %v562 = vld [vmem:[%s555 + $0x18] sm:$0xf]
    %v563 = vld [vmem:[%s555 + $0x1c] sm:$0xf]
    %v564 = vld [vmem:[%s555 + $0x20] sm:$0xf]
    %v565 = vld [vmem:[%s555 + $0x24] sm:$0xf]
    %v566 = vld [vmem:[%s555 + $0x28] sm:$0xf]
    %v567 = vld [vmem:[%s555 + $0x2c] sm:$0xf]
    %v568 = vld [vmem:[%s555 + $0x30] sm:$0xf]
    %v569 = vld [vmem:[%s555 + $0x34] sm:$0xf]
    %v570 = vld [vmem:[%s555 + $0x38] sm:$0xf]
    %v571 = vld [vmem:[%s555 + $0x3c] sm:$0xf]
    %v588 = vunpack.c.l.b16 %v556
    %v589 = vunpack.c.l.b16 %v557
    %v590 = vunpack.c.l.b16 %v558
    %v591 = vunpack.c.l.b16 %v559
    %v592 = vunpack.c.l.b16 %v560
    %v593 = vunpack.c.l.b16 %v561
    %v594 = vunpack.c.l.b16 %v562
    %v595 = vunpack.c.l.b16 %v563
    %v596 = vunpack.c.l.b16 %v564
    %v597 = vunpack.c.l.b16 %v565
    %v598 = vunpack.c.l.b16 %v566
    %v599 = vunpack.c.l.b16 %v567
    %v600 = vunpack.c.l.b16 %v568
    %v601 = vunpack.c.l.b16 %v569
    %v602 = vunpack.c.l.b16 %v570
    %v603 = vunpack.c.l.b16 %v571
    %v604 = vpack.c.b16 %v589, %v588
    %v605 = vpack.c.b16 %v591, %v590
    %v606 = vpack.c.b16 %v593, %v592
    %v607 = vpack.c.b16 %v595, %v594
    %v608 = vpack.c.b16 %v597, %v596
    %v609 = vpack.c.b16 %v599, %v598
    %v610 = vpack.c.b16 %v601, %v600
    %v611 = vpack.c.b16 %v603, %v602
    %620 = vmatpush.bf16.msra.mxu0 %v611
    %621 = vmatpush.bf16.msra.mxu0 %v610
    %622 = vmatpush.bf16.msra.mxu0 %v609
    %623 = vmatpush.bf16.msra.mxu0 %v608
    %624 = vmatpush.bf16.msra.mxu0 %v607
    %625 = vmatpush.bf16.msra.mxu0 %v606
    %626 = vmatpush.bf16.msra.mxu0 %v605
    %627 = vmatpush.bf16.msra.mxu0 %v604
    %628 = vmatmul.bf16.gmra.mxu0 %v552
    %v629 = vpop.f32.mrf.mxu0
    %v630 = vadd.f32 0.0, %v629
    %v631 = vpop.f32.mrf.mxu0
    %v632 = vadd.f32 0.0, %v631
    %633 = vmatmul.bf16.gmra.mxu0 %v553
    %v634 = vpop.f32.mrf.mxu0
    %v635 = vadd.f32 0.0, %v634
    %v636 = vpop.f32.mrf.mxu0
    %v637 = vadd.f32 0.0, %v636
    %638 = vmatmul.bf16.gmra.mxu0 %v554
    %v639 = vpop.f32.mrf.mxu0
    %v640 = vadd.f32 0.0, %v639
    %v641 = vpop.f32.mrf.mxu0
    %642 = vdwg.mxu0
    %v643 = vadd.f32 %v534, %v630
    %v644 = vadd.f32 %v536, %v632
    %v645 = vadd.f32 %v539, %v635
    %v646 = vadd.f32 %v541, %v637
    %v647 = vadd.f32 %v544, %v640
    %v648 = vld [vmem:[#allocation4] sm:$0xff]
    %v649 = vld [vmem:[#allocation4 + $0x8] sm:$0xff]
    %v650 = vld [vmem:[#allocation4 + $0x10] sm:$0xff]
    %v651 = vld [vmem:[#allocation4 + $0x18] sm:$0xff]
    %v652 = vpack.c.bf16 %v649, %v648
    %v653 = vpack.c.bf16 %v651, %v650
    %v654 = vld [vmem:[#allocation10] sm:$0xf]
    %v655 = vld [vmem:[#allocation10 + $0x4] sm:$0xf]
    %v656 = vld [vmem:[#allocation10 + $0x8] sm:$0xf]
    %v657 = vld [vmem:[#allocation10 + $0xc] sm:$0xf]
    %v658 = vld [vmem:[#allocation10 + $0x10] sm:$0xf]
    %v659 = vld [vmem:[#allocation10 + $0x14] sm:$0xf]
    %v660 = vld [vmem:[#allocation10 + $0x18] sm:$0xf]
    %v661 = vld [vmem:[#allocation10 + $0x1c] sm:$0xf]
    %v670 = vunpack.c.l.b16 %v654
    %v671 = vunpack.c.l.b16 %v655
    %v672 = vunpack.c.l.b16 %v656
    %v673 = vunpack.c.l.b16 %v657
    %v674 = vunpack.c.l.b16 %v658
    %v675 = vunpack.c.l.b16 %v659
    %v676 = vunpack.c.l.b16 %v660
    %v677 = vunpack.c.l.b16 %v661
    %v678 = vpack.c.b16 %v671, %v670
    %v679 = vpack.c.b16 %v673, %v672
    %v680 = vpack.c.b16 %v675, %v674
    %v681 = vpack.c.b16 %v677, %v676
    %v687 = vsel %vm95, %v652, 0
    %v690 = vsel %vm95, %v653, 0
    %692 = vmatpush.bf16.msra.mxu0 0
    %693 = vmatpush.bf16.msra.mxu0 0
    %694 = vmatpush.bf16.msra.mxu0 0
    %695 = vmatpush.bf16.msra.mxu0 0
    %696 = vmatpush.bf16.msra.mxu0 %v681
    %697 = vmatpush.bf16.msra.mxu0 %v680
    %698 = vmatpush.bf16.msra.mxu0 %v679
    %699 = vmatpush.bf16.msra.mxu0 %v678
    %700 = vmatmul.bf16.gmra.mxu0 %v687
    %v701 = vpop.f32.mrf.mxu0
    %v702 = vadd.f32 0.0, %v701
    %v703 = vpop.f32.mrf.mxu0
    %v704 = vadd.f32 0.0, %v703
    %705 = vmatmul.bf16.gmra.mxu0 %v690
    %v706 = vpop.f32.mrf.mxu0
    %v707 = vadd.f32 0.0, %v706
    %v708 = vpop.f32.mrf.mxu0
    %v709 = vadd.f32 0.0, %v708
    %710 = vdwg.mxu0
    %v711 = vadd.f32 %v643, %v702
    %v712 = vadd.f32 %v644, %v704
    %713 = vst [vmem:[#allocation12] sm:$0xff] %v711
    %714 = vst [vmem:[#allocation12 + $0x8] sm:$0xff] %v712
    %vm717 = vcmask 1041408
    %v718 = vrot.slane %v707, 6
    %v719 = vrot.slane %v709, 6
    %v720 = vsel %vm717, %v718, %v719
    %v724 = vadd.f32 %v645, %v718
    %v725 = vadd.f32 %v646, %v720
    %v726 = vadd.f32 %v647, %v719
    %s727 = scalar_lea.vmem [#allocation12], 16
    %728 = vst [vmem:[%s727 - $0x2] sm:$0xfc] %v724
    %729 = vst [vmem:[%s727 + $0x6] sm:$0xff] %v725
    %730 = vst [vmem:[%s727 + $0xe] sm:$0x3] %v726
    // Predicated region
    $region34: #{tpu_custom_call.1} parent=1 // pred_check
      _
    $region35: #{tpu_custom_call.1} parent=1 // pred_check_branch
      %732 = sbr.rel (0) target = $region37
    $region36: #{tpu_custom_call.1} parent=1 // pred_region
      %734 = vsyncadd [#allocation6], 0
      %s735 = sshll.u32 [#allocation12], 4
      %s736 = int_to_ptr.vmem [resolvable:$true] %s735
      %s737 = sshll.u32 %s4, 4
      %s738 = int_to_ptr.hbm [resolvable:$true] %s737
      %743 = dma.vmem_to_hbm [thread:$0]  %s736, 512, %s738, [#allocation6], 128, 128, 8
    $region37: #{tpu_custom_call.1} parent=1 // pred_fallthru
      _
    // Predicated region
    $region38: #{tpu_custom_call.1} parent=1 // pred_check
      _
    $region39: #{tpu_custom_call.1} parent=1 // pred_check_branch
      %745 = sbr.rel (0) target = $region41
    $region40: #{tpu_custom_call.1} parent=1 // pred_region
      %747 = dma.done [#allocation6], 512
    $region41: #{tpu_custom_call.1} parent=1 // pred_fallthru
      _
    %748 = vsyncpa [#allocation5], 1
    %749 = vsyncpa [#allocation8], 1
    %750 = vsyncpa [#allocation11], 1
    %751 = vsyncpa [#allocation6], 1

</llo_original>
